<compile_context>
chip_gen: v5e
topology: v5e:2x2
jax: 0.10.0
libtpu: 0.0.40
codegen_flags: <defaults>
</compile_context>

<pallas_src>
import jax
import jax.numpy as jnp
import numpy as np
from jax.experimental import pallas as pl
from jax.experimental.pallas import tpu as pltpu

PAD_ID = 0            # token_to_id['<pad>'] -> deterministic synthetic choice
_NUM_CORE_SPLITS = 2  # leading parallel axis; uses both TCs on v7x, no-op on 1-TC chips


def _round_up(x, m):
    return (x + m - 1) // m * m


_VMEM_LIMIT_CACHE = None


def _vmem_limit_bytes():
    """Chip-aware VMEM limit: ~3/4 of physical capacity (96 MiB on v5e/v6e,
    48 MiB on v7x); conservative fallback if the query fails."""
    global _VMEM_LIMIT_CACHE
    if _VMEM_LIMIT_CACHE is None:
        cap = 64 * 1024 * 1024
        try:
            info = pltpu.get_tpu_info()
            cap = int(getattr(info, "vmem_capacity_bytes", 0)) or cap
        except Exception:
            pass
        _VMEM_LIMIT_CACHE = cap * 3 // 4
    return _VMEM_LIMIT_CACHE


def _sublane_packing(dtype):
    # rows per tile rounded to the dtype's sublane packing (8 f32, 16 bf16, 32 i8)
    return max(8, 32 // jnp.dtype(dtype).itemsize)


def _rows_per_tile(n_rows, vmem_row_bytes, hbm_row_bytes, packing,
                   vmem_budget, max_tile_bytes, force=None):
    """Rows per tile: as many as fit the VMEM budget (double-buffered native
    block + f32 temporaries), capped by a per-DMA-tile byte target, rounded to
    the dtype's sublane packing.  Returns n_rows (full dim) if one tile fits."""
    if force is not None:
        t = min(int(force), n_rows)
        if t < n_rows:
            t = max(packing, t // packing * packing)
        return int(t)
    cand = min(vmem_budget // max(1, vmem_row_bytes),
               max_tile_bytes // max(1, hbm_row_bytes))
    cand = max(packing, cand // packing * packing)
    if cand >= n_rows:
        return int(n_rows)
    return int(cand)


def _as_2d(g):
    """Free (bitcast) 2-D view of an arbitrary-shaped tensor."""
    if g.ndim == 0:
        return g.reshape(1, 1)
    if g.ndim == 1:
        n = g.shape[0]
        for lanes in (1024, 512, 256, 128):
            if n % lanes == 0:
                return g.reshape(n // lanes, lanes)
        # TODO(synk): pathological 1-D sizes fall back to a (1, n) row.
        return g.reshape(1, n)
    return g.reshape(-1, g.shape[-1])


# ---------------------------------------------------------------------------
# Kernel 1: classification CE (ignore_index=PAD_ID) numerator/denominator and
# masked-MSE numerator/denominator, tiled over token rows.
#   grid = (core_split [parallel], row_tile [arbitrary])
#   per-core partial sums are emitted as (num_splits, 1) outputs; the final
#   (6-flop) division happens in the wrapper.
# ---------------------------------------------------------------------------
def _make_loss_kernel(n_rows):
    def kernel(logits_ref, tgt_ref, vp_ref, vt_ref, vm_ref,
               cls_num_ref, cls_den_ref, reg_num_ref, reg_den_ref,
               cls_num_acc, cls_den_acc, reg_num_acc, reg_den_acc):
        c = pl.program_id(0)
        i = pl.program_id(1)
        inner = pl.num_programs(1)
        tile_n = logits_ref.shape[0]

        @pl.when(i == 0)
        def _init():
            cls_num_acc[...] = jnp.zeros_like(cls_num_acc)
            cls_den_acc[...] = jnp.zeros_like(cls_den_acc)
            reg_num_acc[...] = jnp.zeros_like(reg_num_acc)
            reg_den_acc[...] = jnp.zeros_like(reg_den_acc)

        # Row validity mask for the ragged tail / over-covered (clamped) blocks.
        row_base = (c * inner + i) * tile_n
        row_ids = row_base + jax.lax.broadcasted_iota(jnp.int32, (tile_n, 1), 0)
        in_range = row_ids < n_rows

        # Cross-entropy terms (cast to f32 in-kernel; logits ship native dtype).
        logits = logits_ref[...].astype(jnp.float32)        # (tile_n, V)
        tgt = tgt_ref[...]                                   # (tile_n, 1) int32
        m = jnp.max(logits, axis=-1, keepdims=True)
        lse = jnp.log(jnp.sum(jnp.exp(logits - m), axis=-1, keepdims=True)) + m
        col = jax.lax.broadcasted_iota(jnp.int32, logits.shape, 1)
        # fused "picked logit": where + lane reduce, no one-hot materialization
        # NOTE: an out-of-range target silently picks 0 (torch would raise).
        picked = jnp.sum(jnp.where(col == tgt, logits, 0.0),
                         axis=-1, keepdims=True)
        tok_valid = jnp.logical_and(in_range, tgt != PAD_ID)
        # where-select (not multiply) so garbage padded rows can't NaN-poison.
        cls_num_acc[...] += jnp.where(tok_valid, lse - picked, 0.0)
        cls_den_acc[...] += tok_valid.astype(jnp.float32)

        # Masked-MSE terms, tiled alongside the logits rows.
        vp = vp_ref[...].astype(jnp.float32)
        vt = vt_ref[...].astype(jnp.float32)
        vm = vm_ref[...]
        diff = vp - vt
        reg_num_acc[...] += jnp.where(in_range, vm * diff * diff, 0.0)
        reg_den_acc[...] += jnp.where(in_range, vm, 0.0)

        @pl.when(i == inner - 1)
        def _finalize():
            # cross-row reduce deferred to the last step of this core's range
            cls_num_ref[...] = jnp.sum(cls_num_acc[...]).reshape(1, 1)
            cls_den_ref[...] = jnp.sum(cls_den_acc[...]).reshape(1, 1)
            reg_num_ref[...] = jnp.sum(reg_num_acc[...]).reshape(1, 1)
            reg_den_ref[...] = jnp.sum(reg_den_acc[...]).reshape(1, 1)

    return kernel


def cagrad_losses(token_preds, token_targets, value_preds, value_targets,
                  value_mask, _force_tile_rows=None):
    B, T, V = token_preds.shape
    N = B * T

    # free reshapes only -- no pad, no dtype cast of the big tensor
    logits = token_preds.reshape(N, V)
    tgt = token_targets.reshape(N, 1).astype(jnp.int32)
    vp = value_preds.reshape(N, 1)
    vt = value_targets.reshape(N, 1)
    vm = value_mask.reshape(N, 1).astype(jnp.float32)   # tiny (N elements)

    itemsize = jnp.dtype(logits.dtype).itemsize
    packing = _sublane_packing(logits.dtype)
    padded_v = _round_up(V, 128)
    vmem_limit = _vmem_limit_bytes()
    # per-row resident VMEM: 2x double-buffered native tile + ~2 f32 temporaries
    vmem_row = padded_v * (2 * itemsize + 8)
    tile_n = _rows_per_tile(
        N, vmem_row, V * itemsize, packing,
        vmem_budget=int(vmem_limit * 0.7),
        max_tile_bytes=16 * 1024 * 1024,
        force=_force_tile_rows)

    n_blocks = pl.cdiv(N, tile_n)
    num_splits = _NUM_CORE_SPLITS if n_blocks >= 2 else 1
    inner = pl.cdiv(n_blocks, num_splits)
    max_blk = n_blocks - 1

    def blk(c, i):
        # clamp over-covered block indices; the kernel masks them to zero
        return (jnp.minimum(c * inner + i, max_blk), 0)

    cost = pl.CostEstimate(
        flops=int(6 * N * V + 10 * N),
        transcendentals=int(N * V),
        bytes_accessed=int(N * V * itemsize + N * 16 + 16 * num_splits))

    out_sd = jax.ShapeDtypeStruct((num_splits, 1), jnp.float32)
    outs = pl.pallas_call(
        _make_loss_kernel(N),
        out_shape=(out_sd,) * 4,
        grid=(num_splits, inner),
        in_specs=[
            pl.BlockSpec((tile_n, V), blk),   # logits row tile (native dtype)
            pl.BlockSpec((tile_n, 1), blk),   # targets
            pl.BlockSpec((tile_n, 1), blk),   # value preds
            pl.BlockSpec((tile_n, 1), blk),   # value targets
            pl.BlockSpec((tile_n, 1), blk),   # value mask
        ],
        out_specs=tuple(pl.BlockSpec((1, 1), lambda c, i: (c, 0))
                        for _ in range(4)),
        scratch_shapes=[pltpu.VMEM((tile_n, 1), jnp.float32)] * 4,
        compiler_params=pltpu.CompilerParams(
            # core-split axis parallel (v7x megacore); row axis carries scratch
            dimension_semantics=("parallel", "arbitrary"),
            vmem_limit_bytes=vmem_limit),
        cost_estimate=cost,
    )(logits, tgt, vp, vt, vm)

    cls_num, cls_den, reg_num, reg_den = (jnp.sum(o) for o in outs)
    cls = cls_num / cls_den                      # NaN if every target is pad: matches torch
    reg = reg_num / jnp.maximum(reg_den, 1.0)    # 0.0 when the mask is empty: matches torch
    comb = (cls + reg) * 0.5
    return comb, cls, reg


# ---------------------------------------------------------------------------
# Kernel 2a/2b: per-parameter CaGrad gradient combination (as in the module)
#   cos = <g1,g2> / (||g1|| ||g2|| + 1e-8)
#   cos < 0 : out = (g1 - <g1,g2>/(||g2||^2 + 1e-8) * g2) + g2
#   else    : out = g1 + g2
# Reduce pass -> scalar stats; coefficient computed once in jnp; apply pass.
# Gradients stream in native dtype through a free 2-D view of the tensor.
# ---------------------------------------------------------------------------
def _make_reduce_kernel(n_rows):
    def kernel(g1_ref, g2_ref, d_ref, n1_ref, n2_ref, d_acc, n1_acc, n2_acc):
        c = pl.program_id(0)
        i = pl.program_id(1)
        inner = pl.num_programs(1)
        tile_r = g1_ref.shape[0]

        @pl.when(i == 0)
        def _init():
            d_acc[...] = jnp.zeros_like(d_acc)
            n1_acc[...] = jnp.zeros_like(n1_acc)
            n2_acc[...] = jnp.zeros_like(n2_acc)

        row_base = (c * inner + i) * tile_r
        rows = row_base + jax.lax.broadcasted_iota(jnp.int32, (tile_r, 1), 0)
        valid = rows < n_rows

        g1 = g1_ref[...].astype(jnp.float32)
        g2 = g2_ref[...].astype(jnp.float32)
        # per-row lane reduce, accumulated into (tile_r, 1) scratch; the
        # cross-row reduce is deferred to finalize (no per-step scalar chain)
        d_acc[...] += jnp.where(valid, jnp.sum(g1 * g2, axis=1, keepdims=True), 0.0)
        n1_acc[...] += jnp.where(valid, jnp.sum(g1 * g1, axis=1, keepdims=True), 0.0)
        n2_acc[...] += jnp.where(valid, jnp.sum(g2 * g2, axis=1, keepdims=True), 0.0)

        @pl.when(i == inner - 1)
        def _finalize():
            d_ref[...] = jnp.sum(d_acc[...]).reshape(1, 1)
            n1_ref[...] = jnp.sum(n1_acc[...]).reshape(1, 1)
            n2_ref[...] = jnp.sum(n2_acc[...]).reshape(1, 1)

    return kernel


def _apply_kernel(c_ref, g1_ref, g2_ref, out_ref):
    coef = c_ref[...]                                    # (1, 1) f32 scalar
    g1 = g1_ref[...].astype(jnp.float32)
    g2 = g2_ref[...].astype(jnp.float32)
    # unified form: out = g1 + (1 - c) * g2, c = d/(||g2||^2+eps) iff cos < 0
    out_ref[...] = (g1 + (1.0 - coef) * g2).astype(out_ref.dtype)


def cagrad_combine(g1, g2, _force_tile_rows=None):
    """CaGrad combination for ONE parameter tensor (native dtype, any shape)."""
    assert g1.shape == g2.shape
    orig_shape = g1.shape
    g1v = _as_2d(g1)
    g2v = _as_2d(g2)
    R, C = g1v.shape

    itemsize = jnp.dtype(g1v.dtype).itemsize
    packing = _sublane_packing(g1v.dtype)
    padded_c = _round_up(C, 128)
    vmem_limit = _vmem_limit_bytes()
    # two double-buffered native inputs (+ out buffer in apply) + f32 temporaries
    vmem_row = padded_c * (6 * itemsize + 8)
    tile_r = _rows_per_tile(
        R, vmem_row, C * itemsize, packing,
        vmem_budget=int(vmem_limit * 0.7),
        max_tile_bytes=8 * 1024 * 1024,
        force=_force_tile_rows)

    n_blocks = pl.cdiv(R, tile_r)
    num_splits = _NUM_CORE_SPLITS if n_blocks >= 2 else 1
    inner = pl.cdiv(n_blocks, num_splits)
    max_blk = n_blocks - 1

    def blk(c, i):
        return (jnp.minimum(c * inner + i, max_blk), 0)

    out_sd = jax.ShapeDtypeStruct((num_splits, 1), jnp.float32)
    d_p, n1_p, n2_p = pl.pallas_call(
        _make_reduce_kernel(R),
        out_shape=(out_sd,) * 3,
        grid=(num_splits, inner),
        in_specs=[pl.BlockSpec((tile_r, C), blk)] * 2,
        out_specs=tuple(pl.BlockSpec((1, 1), lambda c, i: (c, 0))
                        for _ in range(3)),
        scratch_shapes=[pltpu.VMEM((tile_r, 1), jnp.float32)] * 3,
        compiler_params=pltpu.CompilerParams(
            dimension_semantics=("parallel", "arbitrary"),
            vmem_limit_bytes=vmem_limit),
        cost_estimate=pl.CostEstimate(
            flops=int(6 * R * C), transcendentals=0,
            bytes_accessed=int(2 * R * C * itemsize + 12 * num_splits)),
    )(g1v, g2v)

    # one scalar epilogue between the two calls (not recomputed per tile)
    d = jnp.sum(d_p)
    n1sq = jnp.sum(n1_p)
    n2sq = jnp.sum(n2_p)
    cos = d / (jnp.sqrt(n1sq) * jnp.sqrt(n2sq) + 1e-8)
    coef = jnp.where(cos < 0.0, d / (n2sq + 1e-8), 0.0)
    coef = coef.astype(jnp.float32).reshape(1, 1)

    out = pl.pallas_call(
        _apply_kernel,
        out_shape=jax.ShapeDtypeStruct((R, C), g1v.dtype),
        grid=(n_blocks,),
        in_specs=[
            pl.BlockSpec((1, 1), lambda i: (0, 0)),        # projection coefficient
            pl.BlockSpec((tile_r, C), lambda i: (i, 0)),   # g1
            pl.BlockSpec((tile_r, C), lambda i: (i, 0)),   # g2
        ],
        out_specs=pl.BlockSpec((tile_r, C), lambda i: (i, 0)),
        # alias the 2-D view of g1 (a free bitcast of the caller's buffer)
        input_output_aliases={1: 0},
        compiler_params=pltpu.CompilerParams(
            dimension_semantics=("parallel",),   # elementwise, megacore-safe
            vmem_limit_bytes=vmem_limit),
        cost_estimate=pl.CostEstimate(
            flops=int(3 * R * C), transcendentals=0,
            bytes_accessed=int(3 * R * C * itemsize)),
    )(coef, g1v, g2v)
    return out.reshape(orig_shape)


# ---------------------------------------------------------------------------
# Pure-JAX references (correctness checks + jax.grad glue)
# ---------------------------------------------------------------------------
def _ref_cls_loss(token_preds, token_targets):
    V = token_preds.shape[-1]
    logits = token_preds.reshape(-1, V).astype(jnp.float32)
    tgt = token_targets.reshape(-1)
    logp = jax.nn.log_softmax(logits, axis=-1)
    picked = jnp.take_along_axis(logp, tgt[:, None], axis=-1)[:, 0]
    valid = (tgt != PAD_ID).astype(jnp.float32)
    return -jnp.sum(picked * valid) / jnp.sum(valid)


def _ref_reg_loss(value_preds, value_targets, value_mask):
    vm = value_mask.reshape(-1).astype(jnp.float32)
    diff = (value_preds.reshape(-1) - value_targets.reshape(-1)).astype(jnp.float32)
    cnt = jnp.sum(vm)
    return jnp.sum(vm * diff * diff) / jnp.maximum(cnt, 1.0)


def _ref_cagrad(g1, g2):
    g1f = g1.reshape(-1).astype(jnp.float32)
    g2f = g2.reshape(-1).astype(jnp.float32)
    d = jnp.dot(g1f, g2f)
    n1 = jnp.linalg.norm(g1f)
    n2 = jnp.linalg.norm(g2f)
    cos = d / (n1 * n2 + 1e-8)
    adj = g1 - (d / (n2 ** 2 + 1e-8)) * g2
    return jnp.where(cos < 0, adj + g2, g1 + g2)


if __name__ == "__main__":
    # Small shapes consistent with the module: batch=2, tgt seq len=8,
    # synthetic vocab size=32 (pad id 0).
    B, T, V = 2, 8, 32
    key = jax.random.PRNGKey(0)
    k1, k2, k3, k4, k5, k6, k7 = jax.random.split(key, 7)

    token_preds = jax.random.normal(k1, (B, T, V), dtype=jnp.float32)
    token_targets = jax.random.randint(k2, (B, T), 0, V, dtype=jnp.int32)
    token_targets = token_targets.at[0, 0].set(PAD_ID)   # ensure a pad token
    value_preds = jax.random.normal(k3, (B, T), dtype=jnp.float32)
    value_targets = jax.random.normal(k4, (B, T), dtype=jnp.float32)
    value_mask = jax.random.bernoulli(k5, 0.6, (B, T))

    # --- losses via the tiled Pallas kernel ---
    comb, cls, reg = cagrad_losses(token_preds, token_targets, value_preds,
                                   value_targets, value_mask)
    jax.block_until_ready((comb, cls, reg))

    cls_ref = _ref_cls_loss(token_preds, token_targets)
    reg_ref = _ref_reg_loss(value_preds, value_targets, value_mask)
    comb_ref = (cls_ref + reg_ref) / 2.0
    np.testing.assert_allclose(np.asarray(cls), np.asarray(cls_ref),
                               rtol=1e-5, atol=1e-5)
    np.testing.assert_allclose(np.asarray(reg), np.asarray(reg_ref),
                               rtol=1e-5, atol=1e-5)
    np.testing.assert_allclose(np.asarray(comb), np.asarray(comb_ref),
                               rtol=1e-5, atol=1e-5)

    # --- exercise the ragged-tail + 2-core-split path with a forced row tile ---
    B2, T2 = 2, 9                                      # N = 18: not tile-aligned
    tp2 = jax.random.normal(k6, (B2, T2, V), dtype=jnp.float32)
    tt2 = jax.random.randint(k7, (B2, T2), 0, V, dtype=jnp.int32)
    vp2 = jax.random.normal(k3, (B2, T2), dtype=jnp.float32)
    vt2 = jax.random.normal(k4, (B2, T2), dtype=jnp.float32)
    vm2 = jax.random.bernoulli(k5, 0.5, (B2, T2))
    comb2, cls2, reg2 = cagrad_losses(tp2, tt2, vp2, vt2, vm2,
                                      _force_tile_rows=8)
    jax.block_until_ready((comb2, cls2, reg2))
    np.testing.assert_allclose(np.asarray(cls2),
                               np.asarray(_ref_cls_loss(tp2, tt2)),
                               rtol=1e-5, atol=1e-5)
    np.testing.assert_allclose(np.asarray(reg2),
                               np.asarray(_ref_reg_loss(vp2, vt2, vm2)),
                               rtol=1e-5, atol=1e-5)

    # --- per-tensor CaGrad combination kernels, demonstrated on grads of the
    #     two losses w.r.t. the prediction tensors (plain-JAX autodiff glue) ---
    g_cls = jax.grad(lambda tp, vp: _ref_cls_loss(tp, token_targets),
                     argnums=(0, 1))(token_preds, value_preds)
    g_reg = jax.grad(lambda tp, vp: _ref_reg_loss(vp, value_targets, value_mask),
                     argnums=(0, 1))(token_preds, value_preds)
    for g1, g2 in zip(g_cls, g_reg):
        out = cagrad_combine(g1, g2)
        jax.block_until_ready(out)
        np.testing.assert_allclose(np.asarray(out), np.asarray(_ref_cagrad(g1, g2)),
                                   rtol=1e-4, atol=1e-5)

    # --- conflicting-gradient (cos < 0) case, ragged multi-tile apply path ---
    ga = jax.random.normal(k6, (64, 128), dtype=jnp.float32)
    gb = -ga + 0.1 * jax.random.normal(k7, (64, 128), dtype=jnp.float32)
    outc = cagrad_combine(ga, gb, _force_tile_rows=24)
    jax.block_until_ready(outc)
    np.testing.assert_allclose(np.asarray(outc), np.asarray(_ref_cagrad(ga, gb)),
                               rtol=1e-4, atol=1e-5)

    print("KERNEL_OK")
</pallas_src>

<mosaic_0001>
module attributes {stable_mosaic.version = 11 : i64} {
  func.func @kernel(%arg0: i32, %arg1: i32, %arg2: memref<16x32xf32, #tpu.memory_space<vmem>>, %arg3: memref<16x1xi32, #tpu.memory_space<vmem>>, %arg4: memref<16x1xf32, #tpu.memory_space<vmem>>, %arg5: memref<16x1xf32, #tpu.memory_space<vmem>>, %arg6: memref<16x1xf32, #tpu.memory_space<vmem>>, %arg7: memref<1x1xf32, #tpu.memory_space<vmem>>, %arg8: memref<1x1xf32, #tpu.memory_space<vmem>>, %arg9: memref<1x1xf32, #tpu.memory_space<vmem>>, %arg10: memref<1x1xf32, #tpu.memory_space<vmem>>, %arg11: memref<16x1xf32, #tpu.memory_space<vmem>>, %arg12: memref<16x1xf32, #tpu.memory_space<vmem>>, %arg13: memref<16x1xf32, #tpu.memory_space<vmem>>, %arg14: memref<16x1xf32, #tpu.memory_space<vmem>>) attributes {dimension_semantics = [#tpu.dimension_semantics<parallel>, #tpu.dimension_semantics<arbitrary>], iteration_bounds = array<i64: 1, 1>, scalar_prefetch = 0 : i64, scratch_operands = 4 : i64, tpu.core_type = #tpu.core_type<tc>, window_params = [{transform_indices = @transform_0, window_bounds = array<i64: 16, 32>}, {transform_indices = @transform_1, window_bounds = array<i64: 16, 1>}, {transform_indices = @transform_2, window_bounds = array<i64: 16, 1>}, {transform_indices = @transform_3, window_bounds = array<i64: 16, 1>}, {transform_indices = @transform_4, window_bounds = array<i64: 16, 1>}, {transform_indices = @transform_5, window_bounds = array<i64: 1, 1>}, {transform_indices = @transform_6, window_bounds = array<i64: 1, 1>}, {transform_indices = @transform_7, window_bounds = array<i64: 1, 1>}, {transform_indices = @transform_8, window_bounds = array<i64: 1, 1>}]} {
    %c0_i32 = arith.constant 0 : i32
    %0 = arith.cmpi eq, %arg1, %c0_i32 : i32
    %1 = arith.extui %0 : i1 to i32
    %c0_i32_0 = arith.constant 0 : i32
    %2 = arith.cmpi ne, %1, %c0_i32_0 : i32
    scf.if %2 {
      %cst_36 = arith.constant 0.000000e+00 : f32
      %62 = vector.broadcast %cst_36 : f32 to vector<16x1xf32>
      %c0_37 = arith.constant 0 : index
      %c0_38 = arith.constant 0 : index
      %63 = vector.load %arg11[%c0_37, %c0_38] : memref<16x1xf32, #tpu.memory_space<vmem>>, vector<16x1xf32>
      tpu.vector_store %arg11[%c0_37, %c0_38], %62 {strides = array<i32>} : memref<16x1xf32, #tpu.memory_space<vmem>>, vector<16x1xf32>,
      %cst_39 = arith.constant 0.000000e+00 : f32
      %64 = vector.broadcast %cst_39 : f32 to vector<16x1xf32>
      %c0_40 = arith.constant 0 : index
      %c0_41 = arith.constant 0 : index
      %65 = vector.load %arg12[%c0_40, %c0_41] : memref<16x1xf32, #tpu.memory_space<vmem>>, vector<16x1xf32>
      tpu.vector_store %arg12[%c0_40, %c0_41], %64 {strides = array<i32>} : memref<16x1xf32, #tpu.memory_space<vmem>>, vector<16x1xf32>,
      %cst_42 = arith.constant 0.000000e+00 : f32
      %66 = vector.broadcast %cst_42 : f32 to vector<16x1xf32>
      %c0_43 = arith.constant 0 : index
      %c0_44 = arith.constant 0 : index
      %67 = vector.load %arg13[%c0_43, %c0_44] : memref<16x1xf32, #tpu.memory_space<vmem>>, vector<16x1xf32>
      tpu.vector_store %arg13[%c0_43, %c0_44], %66 {strides = array<i32>} : memref<16x1xf32, #tpu.memory_space<vmem>>, vector<16x1xf32>,
      %cst_45 = arith.constant 0.000000e+00 : f32
      %68 = vector.broadcast %cst_45 : f32 to vector<16x1xf32>
      %c0_46 = arith.constant 0 : index
      %c0_47 = arith.constant 0 : index
      %69 = vector.load %arg14[%c0_46, %c0_47] : memref<16x1xf32, #tpu.memory_space<vmem>>, vector<16x1xf32>
      tpu.vector_store %arg14[%c0_46, %c0_47], %68 {strides = array<i32>} : memref<16x1xf32, #tpu.memory_space<vmem>>, vector<16x1xf32>,
    } else {
    }
    %c1_i32 = arith.constant 1 : i32
    %3 = arith.muli %arg0, %c1_i32 : i32
    %4 = arith.addi %3, %arg1 : i32
    %c16_i32 = arith.constant 16 : i32
    %5 = arith.muli %4, %c16_i32 : i32
    %6 = tpu.iota {dimensions = array<i32: 0>} : vector<16x1xi32>
    %7 = vector.broadcast %5 : i32 to vector<16x1xi32>
    %8 = arith.addi %7, %6 : vector<16x1xi32>
    %c16_i32_1 = arith.constant 16 : i32
    %9 = vector.broadcast %c16_i32_1 : i32 to vector<16x1xi32>
    %10 = arith.cmpi slt, %8, %9 : vector<16x1xi32>
    %c0 = arith.constant 0 : index
    %c0_2 = arith.constant 0 : index
    %11 = vector.load %arg2[%c0, %c0_2] : memref<16x32xf32, #tpu.memory_space<vmem>>, vector<16x32xf32>
    %c0_3 = arith.constant 0 : index
    %c0_4 = arith.constant 0 : index
    %12 = vector.load %arg3[%c0_3, %c0_4] : memref<16x1xi32, #tpu.memory_space<vmem>>, vector<16x1xi32>
    %cst = arith.constant dense<0xFF800000> : vector<16xf32>
    %13 = vector.multi_reduction <maximumf>, %11, %cst [1] : vector<16x32xf32> to vector<16xf32>
    %14 = vector.shape_cast %13 : vector<16xf32> to vector<16x1xf32>
    %15 = vector.broadcast %14 : vector<16x1xf32> to vector<16x32xf32>
    %16 = arith.subf %11, %15 : vector<16x32xf32>
    %17 = math.exp %16 : vector<16x32xf32>
    %cst_5 = arith.constant dense<0.000000e+00> : vector<16xf32>
    %18 = vector.multi_reduction <add>, %17, %cst_5 [1] : vector<16x32xf32> to vector<16xf32>
    %19 = vector.shape_cast %18 : vector<16xf32> to vector<16x1xf32>
    %20 = math.log %19 : vector<16x1xf32>
    %21 = arith.addf %20, %14 : vector<16x1xf32>
    %22 = tpu.iota {dimensions = array<i32: 1>} : vector<16x32xi32>
    %23 = vector.broadcast %12 : vector<16x1xi32> to vector<16x32xi32>
    %24 = arith.cmpi eq, %22, %23 : vector<16x32xi32>
    %cst_6 = arith.constant 0.000000e+00 : f32
    %25 = vector.broadcast %cst_6 : f32 to vector<16x32xf32>
    %26 = arith.select %24, %11, %25 : vector<16x32xi1>, vector<16x32xf32>
    %cst_7 = arith.constant dense<0.000000e+00> : vector<16xf32>
    %27 = vector.multi_reduction <add>, %26, %cst_7 [1] : vector<16x32xf32> to vector<16xf32>
    %28 = vector.shape_cast %27 : vector<16xf32> to vector<16x1xf32>
    %c0_i32_8 = arith.constant 0 : i32
    %29 = vector.broadcast %c0_i32_8 : i32 to vector<16x1xi32>
    %30 = arith.cmpi ne, %12, %29 : vector<16x1xi32>
    %31 = arith.andi %10, %30 : vector<16x1xi1>
    %c0_9 = arith.constant 0 : index
    %c0_10 = arith.constant 0 : index
    %32 = vector.load %arg11[%c0_9, %c0_10] : memref<16x1xf32, #tpu.memory_space<vmem>>, vector<16x1xf32>
    %33 = arith.subf %21, %28 : vector<16x1xf32>
    %cst_11 = arith.constant 0.000000e+00 : f32
    %34 = vector.broadcast %cst_11 : f32 to vector<16x1xf32>
    %35 = arith.select %31, %33, %34 : vector<16x1xi1>, vector<16x1xf32>
    %36 = arith.addf %32, %35 : vector<16x1xf32>
    %c0_12 = arith.constant 0 : index
    %c0_13 = arith.constant 0 : index
    %37 = vector.load %arg11[%c0_12, %c0_13] : memref<16x1xf32, #tpu.memory_space<vmem>>, vector<16x1xf32>
    tpu.vector_store %arg11[%c0_12, %c0_13], %36 {strides = array<i32>} : memref<16x1xf32, #tpu.memory_space<vmem>>, vector<16x1xf32>,
    %c0_14 = arith.constant 0 : index
    %c0_15 = arith.constant 0 : index
    %38 = vector.load %arg12[%c0_14, %c0_15] : memref<16x1xf32, #tpu.memory_space<vmem>>, vector<16x1xf32>
    %39 = arith.extui %31 : vector<16x1xi1> to vector<16x1xi32>
    %40 = arith.sitofp %39 : vector<16x1xi32> to vector<16x1xf32>
    %41 = arith.addf %38, %40 : vector<16x1xf32>
    %c0_16 = arith.constant 0 : index
    %c0_17 = arith.constant 0 : index
    %42 = vector.load %arg12[%c0_16, %c0_17] : memref<16x1xf32, #tpu.memory_space<vmem>>, vector<16x1xf32>
    tpu.vector_store %arg12[%c0_16, %c0_17], %41 {strides = array<i32>} : memref<16x1xf32, #tpu.memory_space<vmem>>, vector<16x1xf32>,
    %c0_18 = arith.constant 0 : index
    %c0_19 = arith.constant 0 : index
    %43 = vector.load %arg4[%c0_18, %c0_19] : memref<16x1xf32, #tpu.memory_space<vmem>>, vector<16x1xf32>
    %c0_20 = arith.constant 0 : index
    %c0_21 = arith.constant 0 : index
    %44 = vector.load %arg5[%c0_20, %c0_21] : memref<16x1xf32, #tpu.memory_space<vmem>>, vector<16x1xf32>
    %c0_22 = arith.constant 0 : index
    %c0_23 = arith.constant 0 : index
    %45 = vector.load %arg6[%c0_22, %c0_23] : memref<16x1xf32, #tpu.memory_space<vmem>>, vector<16x1xf32>
    %46 = arith.subf %43, %44 : vector<16x1xf32>
    %c0_24 = arith.constant 0 : index
    %c0_25 = arith.constant 0 : index
    %47 = vector.load %arg13[%c0_24, %c0_25] : memref<16x1xf32, #tpu.memory_space<vmem>>, vector<16x1xf32>
    %48 = arith.mulf %45, %46 : vector<16x1xf32>
    %49 = arith.mulf %48, %46 : vector<16x1xf32>
    %cst_26 = arith.constant 0.000000e+00 : f32
    %50 = vector.broadcast %cst_26 : f32 to vector<16x1xf32>
    %51 = arith.select %10, %49, %50 : vector<16x1xi1>, vector<16x1xf32>
    %52 = arith.addf %47, %51 : vector<16x1xf32>
    %c0_27 = arith.constant 0 : index
    %c0_28 = arith.constant 0 : index
    %53 = vector.load %arg13[%c0_27, %c0_28] : memref<16x1xf32, #tpu.memory_space<vmem>>, vector<16x1xf32>
    tpu.vector_store %arg13[%c0_27, %c0_28], %52 {strides = array<i32>} : memref<16x1xf32, #tpu.memory_space<vmem>>, vector<16x1xf32>,
    %c0_29 = arith.constant 0 : index
    %c0_30 = arith.constant 0 : index
    %54 = vector.load %arg14[%c0_29, %c0_30] : memref<16x1xf32, #tpu.memory_space<vmem>>, vector<16x1xf32>
    %cst_31 = arith.constant 0.000000e+00 : f32
    %55 = vector.broadcast %cst_31 : f32 to vector<16x1xf32>
    %56 = arith.select %10, %45, %55 : vector<16x1xi1>, vector<16x1xf32>
    %57 = arith.addf %54, %56 : vector<16x1xf32>
    %c0_32 = arith.constant 0 : index
    %c0_33 = arith.constant 0 : index
    %58 = vector.load %arg14[%c0_32, %c0_33] : memref<16x1xf32, #tpu.memory_space<vmem>>, vector<16x1xf32>
    tpu.vector_store %arg14[%c0_32, %c0_33], %57 {strides = array<i32>} : memref<16x1xf32, #tpu.memory_space<vmem>>, vector<16x1xf32>,
    %c0_i32_34 = arith.constant 0 : i32
    %59 = arith.cmpi eq, %arg1, %c0_i32_34 : i32
    %60 = arith.extui %59 : i1 to i32
    %c0_i32_35 = arith.constant 0 : i32
    %61 = arith.cmpi ne, %60, %c0_i32_35 : i32
    scf.if %61 {
      %c0_36 = arith.constant 0 : index
      %c0_37 = arith.constant 0 : index
      %62 = vector.load %arg11[%c0_36, %c0_37] : memref<16x1xf32, #tpu.memory_space<vmem>>, vector<16x1xf32>
      %63 = vector.shape_cast %62 : vector<16x1xf32> to vector<1x16x1xf32>
      %cst_38 = arith.constant dense<0.000000e+00> : vector<1xf32>
      %64 = vector.multi_reduction <add>, %63, %cst_38 [1, 2] : vector<1x16x1xf32> to vector<1xf32>
      %65 = vector.shape_cast %64 : vector<1xf32> to vector<1x1x1xf32>
      %66 = vector.extract %65[0, 0, 0] : f32 from vector<1x1x1xf32>
      %67 = vector.broadcast %66 : f32 to vector<1x1xf32>
      %c0_39 = arith.constant 0 : index
      %c0_40 = arith.constant 0 : index
      %68 = vector.load %arg7[%c0_39, %c0_40] : memref<1x1xf32, #tpu.memory_space<vmem>>, vector<1x1xf32>
      tpu.vector_store %arg7[%c0_39, %c0_40], %67 {strides = array<i32>} : memref<1x1xf32, #tpu.memory_space<vmem>>, vector<1x1xf32>,
      %c0_41 = arith.constant 0 : index
      %c0_42 = arith.constant 0 : index
      %69 = vector.load %arg12[%c0_41, %c0_42] : memref<16x1xf32, #tpu.memory_space<vmem>>, vector<16x1xf32>
      %70 = vector.shape_cast %69 : vector<16x1xf32> to vector<1x16x1xf32>
      %cst_43 = arith.constant dense<0.000000e+00> : vector<1xf32>
      %71 = vector.multi_reduction <add>, %70, %cst_43 [1, 2] : vector<1x16x1xf32> to vector<1xf32>
      %72 = vector.shape_cast %71 : vector<1xf32> to vector<1x1x1xf32>
      %73 = vector.extract %72[0, 0, 0] : f32 from vector<1x1x1xf32>
      %74 = vector.broadcast %73 : f32 to vector<1x1xf32>
      %c0_44 = arith.constant 0 : index
      %c0_45 = arith.constant 0 : index
      %75 = vector.load %arg8[%c0_44, %c0_45] : memref<1x1xf32, #tpu.memory_space<vmem>>, vector<1x1xf32>
      tpu.vector_store %arg8[%c0_44, %c0_45], %74 {strides = array<i32>} : memref<1x1xf32, #tpu.memory_space<vmem>>, vector<1x1xf32>,
      %c0_46 = arith.constant 0 : index
      %c0_47 = arith.constant 0 : index
      %76 = vector.load %arg13[%c0_46, %c0_47] : memref<16x1xf32, #tpu.memory_space<vmem>>, vector<16x1xf32>
      %77 = vector.shape_cast %76 : vector<16x1xf32> to vector<1x16x1xf32>
      %cst_48 = arith.constant dense<0.000000e+00> : vector<1xf32>
      %78 = vector.multi_reduction <add>, %77, %cst_48 [1, 2] : vector<1x16x1xf32> to vector<1xf32>
      %79 = vector.shape_cast %78 : vector<1xf32> to vector<1x1x1xf32>
      %80 = vector.extract %79[0, 0, 0] : f32 from vector<1x1x1xf32>
      %81 = vector.broadcast %80 : f32 to vector<1x1xf32>
      %c0_49 = arith.constant 0 : index
      %c0_50 = arith.constant 0 : index
      %82 = vector.load %arg9[%c0_49, %c0_50] : memref<1x1xf32, #tpu.memory_space<vmem>>, vector<1x1xf32>
      tpu.vector_store %arg9[%c0_49, %c0_50], %81 {strides = array<i32>} : memref<1x1xf32, #tpu.memory_space<vmem>>, vector<1x1xf32>,
      %c0_51 = arith.constant 0 : index
      %c0_52 = arith.constant 0 : index
      %83 = vector.load %arg14[%c0_51, %c0_52] : memref<16x1xf32, #tpu.memory_space<vmem>>, vector<16x1xf32>
      %84 = vector.shape_cast %83 : vector<16x1xf32> to vector<1x16x1xf32>
      %cst_53 = arith.constant dense<0.000000e+00> : vector<1xf32>
      %85 = vector.multi_reduction <add>, %84, %cst_53 [1, 2] : vector<1x16x1xf32> to vector<1xf32>
      %86 = vector.shape_cast %85 : vector<1xf32> to vector<1x1x1xf32>
      %87 = vector.extract %86[0, 0, 0] : f32 from vector<1x1x1xf32>
      %88 = vector.broadcast %87 : f32 to vector<1x1xf32>
      %c0_54 = arith.constant 0 : index
      %c0_55 = arith.constant 0 : index
      %89 = vector.load %arg10[%c0_54, %c0_55] : memref<1x1xf32, #tpu.memory_space<vmem>>, vector<1x1xf32>
      tpu.vector_store %arg10[%c0_54, %c0_55], %88 {strides = array<i32>} : memref<1x1xf32, #tpu.memory_space<vmem>>, vector<1x1xf32>,
    } else {
    }
    return
  }
  func.func @transform_0(%arg0: i32, %arg1: i32) -> (i32, i32) {
    %c1_i32 = arith.constant 1 : i32
    %0 = arith.muli %arg0, %c1_i32 : i32
    %1 = arith.addi %0, %arg1 : i32
    %c0_i32 = arith.constant 0 : i32
    %2 = arith.minsi %1, %c0_i32 : i32
    %c0_i32_0 = arith.constant 0 : i32
    %c0_i32_1 = arith.constant 0 : i32
    return %2, %c0_i32_0 : i32, i32
  }
  func.func @transform_1(%arg0: i32, %arg1: i32) -> (i32, i32) {
    %c1_i32 = arith.constant 1 : i32
    %0 = arith.muli %arg0, %c1_i32 : i32
    %1 = arith.addi %0, %arg1 : i32
    %c0_i32 = arith.constant 0 : i32
    %2 = arith.minsi %1, %c0_i32 : i32
    %c0_i32_0 = arith.constant 0 : i32
    %c0_i32_1 = arith.constant 0 : i32
    return %2, %c0_i32_0 : i32, i32
  }
  func.func @transform_2(%arg0: i32, %arg1: i32) -> (i32, i32) {
    %c1_i32 = arith.constant 1 : i32
    %0 = arith.muli %arg0, %c1_i32 : i32
    %1 = arith.addi %0, %arg1 : i32
    %c0_i32 = arith.constant 0 : i32
    %2 = arith.minsi %1, %c0_i32 : i32
    %c0_i32_0 = arith.constant 0 : i32
    %c0_i32_1 = arith.constant 0 : i32
    return %2, %c0_i32_0 : i32, i32
  }
  func.func @transform_3(%arg0: i32, %arg1: i32) -> (i32, i32) {
    %c1_i32 = arith.constant 1 : i32
    %0 = arith.muli %arg0, %c1_i32 : i32
    %1 = arith.addi %0, %arg1 : i32
    %c0_i32 = arith.constant 0 : i32
    %2 = arith.minsi %1, %c0_i32 : i32
    %c0_i32_0 = arith.constant 0 : i32
    %c0_i32_1 = arith.constant 0 : i32
    return %2, %c0_i32_0 : i32, i32
  }
  func.func @transform_4(%arg0: i32, %arg1: i32) -> (i32, i32) {
    %c1_i32 = arith.constant 1 : i32
    %0 = arith.muli %arg0, %c1_i32 : i32
    %1 = arith.addi %0, %arg1 : i32
    %c0_i32 = arith.constant 0 : i32
    %2 = arith.minsi %1, %c0_i32 : i32
    %c0_i32_0 = arith.constant 0 : i32
    %c0_i32_1 = arith.constant 0 : i32
    return %2, %c0_i32_0 : i32, i32
  }
  func.func @transform_5(%arg0: i32, %arg1: i32) -> (i32, i32) {
    %c0_i32 = arith.constant 0 : i32
    %c0_i32_0 = arith.constant 0 : i32
    return %arg0, %c0_i32 : i32, i32
  }
  func.func @transform_6(%arg0: i32, %arg1: i32) -> (i32, i32) {
    %c0_i32 = arith.constant 0 : i32
    %c0_i32_0 = arith.constant 0 : i32
    return %arg0, %c0_i32 : i32, i32
  }
  func.func @transform_7(%arg0: i32, %arg1: i32) -> (i32, i32) {
    %c0_i32 = arith.constant 0 : i32
    %c0_i32_0 = arith.constant 0 : i32
    return %arg0, %c0_i32 : i32, i32
  }
  func.func @transform_8(%arg0: i32, %arg1: i32) -> (i32, i32) {
    %c0_i32 = arith.constant 0 : i32
    %c0_i32_0 = arith.constant 0 : i32
    return %arg0, %c0_i32 : i32, i32
  }
}

</mosaic_0001>

<llo_original>
// kernel: tpu_custom_call.1
$region0: #{tpu_custom_call.1}
  #allocation0 [shape = 'u32[]', space=smem, size = 0x4, offset = 0x4, fixed_abs, tag = 'smem constant byte address 0x4 - core index']
  #allocation1 [shape = 'u32[72,128]{1,0:T(1,128)}', space=vmem, size = 0x9000, scoped, tag = 'internal scratch']
  #allocation2 [shape = 'f32[16,1]{1,0:T(8,128)}', space=vmem, size = 0x2000, scoped, tag = 'scratch operand']
  #allocation3 [shape = 'f32[16,1]{1,0:T(8,128)}', space=vmem, size = 0x2000, scoped, tag = 'scratch operand']
  #allocation4 [shape = 'f32[16,1]{1,0:T(8,128)}', space=vmem, size = 0x2000, scoped, tag = 'scratch operand']
  #allocation5 [shape = 'f32[16,1]{1,0:T(8,128)}', space=vmem, size = 0x2000, scoped, tag = 'scratch operand']
  %s0 = inlined_call_operand.vmem [shape: f32[16,32], index: 0, kind: input, shape index: {}]
  %s1 = inlined_call_operand.vmem [shape: s32[16,1], index: 1, kind: input, shape index: {}]
  %s2 = inlined_call_operand.vmem [shape: f32[16,1], index: 2, kind: input, shape index: {}]
  %s3 = inlined_call_operand.vmem [shape: f32[16,1], index: 3, kind: input, shape index: {}]
  %s4 = inlined_call_operand.vmem [shape: f32[16,1], index: 4, kind: input, shape index: {}]
  %s5 = inlined_call_operand.hbm [shape: f32[1,1], index: 5, kind: output, shape index: {0}]
  %s6 = inlined_call_operand.hbm [shape: f32[1,1], index: 6, kind: output, shape index: {1}]
  %s7 = inlined_call_operand.hbm [shape: f32[1,1], index: 7, kind: output, shape index: {2}]
  %s8 = inlined_call_operand.hbm [shape: f32[1,1], index: 8, kind: output, shape index: {3}]
  %9 = xla_tuple %s5, %s6, %s7, %s8
  %s10 = sld [smem:[#allocation0]]
  $region62: #{tpu_custom_call.1} parent=0
    _
  %s12 = ssub.s32 1, %s10
  %s13 = scalar_select 0, %s12, %s10
  $region1: #{tpu_custom_call.1} parent=0
    #allocation6 [shape = 'u8[512]{0}', space=vmem, size = 0x400, scoped, tag = 'output window, operand 0, single buffered']
    #allocation7 [shape = 's32[1]{0}', space=sflag, size = 0x4, scoped, tag = 'scoped memory for tpu_custom_call.1']
    #allocation8 [shape = 'u8[512]{0}', space=vmem, size = 0x400, scoped, tag = 'output window, operand 1, single buffered']
    #allocation9 [shape = 's32[1]{0}', space=sflag, size = 0x4, scoped, tag = 'scoped memory for tpu_custom_call.1']
    #allocation10 [shape = 'u8[512]{0}', space=vmem, size = 0x400, scoped, tag = 'output window, operand 2, single buffered']
    #allocation11 [shape = 'u8[512]{0}', space=vmem, size = 0x400, scoped, tag = 'output window, operand 3, single buffered']
    #allocation12 [shape = 's32[1]{0}', space=sflag, size = 0x4, scoped, tag = 'scoped memory for tpu_custom_call.1']
    %14 = vsyncpa [#allocation7], 0
    %15 = vsyncpa [#allocation9], 0
    %16 = vsyncpa [#allocation12], 0
    // Predicated region
    $region2: #{tpu_custom_call.1} parent=1 // pred_check
      _
    $region3: #{tpu_custom_call.1} parent=1 // pred_check_branch
      %18 = sbr.rel (0) target = $region5
    $region4: #{tpu_custom_call.1} parent=1 // pred_region
      %s19 = sadd.s32 0, 0
      %p20 = scmp.lt.s32.totalorder %s19, 0
      %s21 = scalar_select %p20, %s19, 0
      %s22 = smul.u32 2, %s21
      %p23 = scmp.lt.s32.totalorder %s22, 1
      %s24 = scalar_select %p23, %s22, 1
      %s25 = smul.addr %s24, 8
      %s26 = scalar_lea.vmem %s0, %s25
      %s27 = sadd.s32 0, 0
      %p28 = scmp.lt.s32.totalorder %s27, 0
      %s29 = scalar_select %p28, %s27, 0
      %s30 = smul.u32 2, %s29
    $region5: #{tpu_custom_call.1} parent=1 // pred_fallthru
      _
    // Predicated region
    $region6: #{tpu_custom_call.1} parent=1 // pred_check
      _
    $region7: #{tpu_custom_call.1} parent=1 // pred_check_branch
      %32 = sbr.rel (0) target = $region9
    $region8: #{tpu_custom_call.1} parent=1 // pred_region
      %s33 = sadd.s32 0, 0
      %p34 = scmp.lt.s32.totalorder %s33, 0
      %s35 = scalar_select %p34, %s33, 0
      %s36 = smul.u32 2, %s35
      %p37 = scmp.lt.s32.totalorder %s36, 1
      %s38 = scalar_select %p37, %s36, 1
      %s39 = smul.addr %s38, 8
      %s40 = scalar_lea.vmem %s1, %s39
      %s41 = sadd.s32 0, 0
      %p42 = scmp.lt.s32.totalorder %s41, 0
      %s43 = scalar_select %p42, %s41, 0
      %s44 = smul.u32 2, %s43
    $region9: #{tpu_custom_call.1} parent=1 // pred_fallthru
      _
    // Predicated region
    $region10: #{tpu_custom_call.1} parent=1 // pred_check
      _
    $region11: #{tpu_custom_call.1} parent=1 // pred_check_branch
      %46 = sbr.rel (0) target = $region13
    $region12: #{tpu_custom_call.1} parent=1 // pred_region
      %s47 = sadd.s32 0, 0
      %p48 = scmp.lt.s32.totalorder %s47, 0
      %s49 = scalar_select %p48, %s47, 0
      %s50 = smul.u32 2, %s49
      %p51 = scmp.lt.s32.totalorder %s50, 1
      %s52 = scalar_select %p51, %s50, 1
      %s53 = smul.addr %s52, 8
      %s54 = scalar_lea.vmem %s2, %s53
      %s55 = sadd.s32 0, 0
      %p56 = scmp.lt.s32.totalorder %s55, 0
      %s57 = scalar_select %p56, %s55, 0
      %s58 = smul.u32 2, %s57
    $region13: #{tpu_custom_call.1} parent=1 // pred_fallthru
      _
    // Predicated region
    $region14: #{tpu_custom_call.1} parent=1 // pred_check
      _
    $region15: #{tpu_custom_call.1} parent=1 // pred_check_branch
      %60 = sbr.rel (0) target = $region17
    $region16: #{tpu_custom_call.1} parent=1 // pred_region
      %s61 = sadd.s32 0, 0
      %p62 = scmp.lt.s32.totalorder %s61, 0
      %s63 = scalar_select %p62, %s61, 0
      %s64 = smul.u32 2, %s63
      %p65 = scmp.lt.s32.totalorder %s64, 1
      %s66 = scalar_select %p65, %s64, 1
      %s67 = smul.addr %s66, 8
      %s68 = scalar_lea.vmem %s3, %s67
      %s69 = sadd.s32 0, 0
      %p70 = scmp.lt.s32.totalorder %s69, 0
      %s71 = scalar_select %p70, %s69, 0
      %s72 = smul.u32 2, %s71
    $region17: #{tpu_custom_call.1} parent=1 // pred_fallthru
      _
    // Predicated region
    $region18: #{tpu_custom_call.1} parent=1 // pred_check
      _
    $region19: #{tpu_custom_call.1} parent=1 // pred_check_branch
      %74 = sbr.rel (0) target = $region21
    $region20: #{tpu_custom_call.1} parent=1 // pred_region
      %s75 = sadd.s32 0, 0
      %p76 = scmp.lt.s32.totalorder %s75, 0
      %s77 = scalar_select %p76, %s75, 0
      %s78 = smul.u32 2, %s77
      %p79 = scmp.lt.s32.totalorder %s78, 1
      %s80 = scalar_select %p79, %s78, 1
      %s81 = smul.addr %s80, 8
      %s82 = scalar_lea.vmem %s4, %s81
      %s83 = sadd.s32 0, 0
      %p84 = scmp.lt.s32.totalorder %s83, 0
      %s85 = scalar_select %p84, %s83, 0
      %s86 = smul.u32 2, %s85
    $region21: #{tpu_custom_call.1} parent=1 // pred_fallthru
      _
    %s87 = sadd.s32 0, 0
    %p88 = scmp.lt.s32.totalorder %s87, 0
    %s89 = scalar_select %p88, %s87, 0
    %s90 = smul.u32 2, %s89
    %p91 = scmp.lt.s32.totalorder %s90, 1
    %s92 = scalar_select %p91, %s90, 1
    %s93 = smul.addr %s92, 8
    %s94 = scalar_lea.vmem %s0, %s93
    %s95 = sadd.s32 0, 0
    %p96 = scmp.lt.s32.totalorder %s95, 0
    %s97 = scalar_select %p96, %s95, 0
    %s98 = smul.u32 2, %s97
    %p99 = scmp.lt.s32.totalorder %s98, 1
    %s100 = scalar_select %p99, %s98, 1
    %s101 = smul.addr %s100, 8
    %s102 = scalar_lea.vmem %s1, %s101
    %s103 = sadd.s32 0, 0
    %p104 = scmp.lt.s32.totalorder %s103, 0
    %s105 = scalar_select %p104, %s103, 0
    %s106 = smul.u32 2, %s105
    %p107 = scmp.lt.s32.totalorder %s106, 1
    %s108 = scalar_select %p107, %s106, 1
    %s109 = smul.addr %s108, 8
    %s110 = scalar_lea.vmem %s2, %s109
    %s111 = sadd.s32 0, 0
    %p112 = scmp.lt.s32.totalorder %s111, 0
    %s113 = scalar_select %p112, %s111, 0
    %s114 = smul.u32 2, %s113
    %p115 = scmp.lt.s32.totalorder %s114, 1
    %s116 = scalar_select %p115, %s114, 1
    %s117 = smul.addr %s116, 8
    %s118 = scalar_lea.vmem %s3, %s117
    %s119 = sadd.s32 0, 0
    %p120 = scmp.lt.s32.totalorder %s119, 0
    %s121 = scalar_select %p120, %s119, 0
    %s122 = smul.u32 2, %s121
    %p123 = scmp.lt.s32.totalorder %s122, 1
    %s124 = scalar_select %p123, %s122, 1
    %s125 = smul.addr %s124, 8
    %s126 = scalar_lea.vmem %s4, %s125
    %s127 = sadd.s32 0, 0
    %p128 = scmp.lt.s32.totalorder %s127, 0
    %s129 = scalar_select %p128, %s127, 0
    %s130 = smul.u32 2, %s129
    %p131 = scmp.lt.s32.totalorder %s130, 1
    %s132 = scalar_select %p131, %s130, 1
    %s133 = smul.addr %s132, 8
    %s134 = scalar_lea.vmem %s0, %s133
    %s135 = sadd.s32 0, 0
    %p136 = scmp.lt.s32.totalorder %s135, 0
    %s137 = scalar_select %p136, %s135, 0
    %s138 = smul.u32 2, %s137
    %s139 = sadd.s32 0, 0
    %p140 = scmp.lt.s32.totalorder %s139, 0
    %s141 = scalar_select %p140, %s139, 0
    %s142 = smul.u32 2, %s141
    %p143 = scmp.lt.s32.totalorder %s142, 1
    %s144 = scalar_select %p143, %s142, 1
    %s145 = smul.addr %s144, 8
    %s146 = scalar_lea.vmem %s1, %s145
    %s147 = sadd.s32 0, 0
    %p148 = scmp.lt.s32.totalorder %s147, 0
    %s149 = scalar_select %p148, %s147, 0
    %s150 = smul.u32 2, %s149
    %s151 = sadd.s32 0, 0
    %p152 = scmp.lt.s32.totalorder %s151, 0
    %s153 = scalar_select %p152, %s151, 0
    %s154 = smul.u32 2, %s153
    %p155 = scmp.lt.s32.totalorder %s154, 1
    %s156 = scalar_select %p155, %s154, 1
    %s157 = smul.addr %s156, 8
    %s158 = scalar_lea.vmem %s2, %s157
    %s159 = sadd.s32 0, 0
    %p160 = scmp.lt.s32.totalorder %s159, 0
    %s161 = scalar_select %p160, %s159, 0
    %s162 = smul.u32 2, %s161
    %s163 = sadd.s32 0, 0
    %p164 = scmp.lt.s32.totalorder %s163, 0
    %s165 = scalar_select %p164, %s163, 0
    %s166 = smul.u32 2, %s165
    %p167 = scmp.lt.s32.totalorder %s166, 1
    %s168 = scalar_select %p167, %s166, 1
    %s169 = smul.addr %s168, 8
    %s170 = scalar_lea.vmem %s3, %s169
    %s171 = sadd.s32 0, 0
    %p172 = scmp.lt.s32.totalorder %s171, 0
    %s173 = scalar_select %p172, %s171, 0
    %s174 = smul.u32 2, %s173
    %s175 = sadd.s32 0, 0
    %p176 = scmp.lt.s32.totalorder %s175, 0
    %s177 = scalar_select %p176, %s175, 0
    %s178 = smul.u32 2, %s177
    %p179 = scmp.lt.s32.totalorder %s178, 1
    %s180 = scalar_select %p179, %s178, 1
    %s181 = smul.addr %s180, 8
    %s182 = scalar_lea.vmem %s4, %s181
    %s183 = sadd.s32 0, 0
    %p184 = scmp.lt.s32.totalorder %s183, 0
    %s185 = scalar_select %p184, %s183, 0
    %s186 = smul.u32 2, %s185
    %p187 = scmp.eq.s32.totalorder 0, 0
    // Predicated region
    $region22: #{tpu_custom_call.1} parent=1 // pred_check
      %p188 = pneg %p187
    $region23: #{tpu_custom_call.1} parent=1 // pred_check_branch
      %190 = sbr.rel (%p188) target = $region25
    $region24: #{tpu_custom_call.1} parent=1 // pred_region
      %vm191 = vcmask 7168
      %192 = vst.msk [vmem:[#allocation2] sm:$0xff] %vm191, 0.0
      %193 = vst.msk [vmem:[#allocation2 + $0x8] sm:$0xff] %vm191, 0.0
      %194 = vst.msk [vmem:[#allocation3] sm:$0xff] %vm191, 0.0
      %195 = vst.msk [vmem:[#allocation3 + $0x8] sm:$0xff] %vm191, 0.0
      %196 = vst.msk [vmem:[#allocation4] sm:$0xff] %vm191, 0.0
      %197 = vst.msk [vmem:[#allocation4 + $0x8] sm:$0xff] %vm191, 0.0
      %198 = vst.msk [vmem:[#allocation5] sm:$0xff] %vm191, 0.0
      %199 = vst.msk [vmem:[#allocation5 + $0x8] sm:$0xff] %vm191, 0.0
    $region25: #{tpu_custom_call.1} parent=1 // pred_fallthru
      _
    %s200 = sadd.s32 0, 0
    %s201 = smul.u32 %s200, 16
    %v202 = vlaneseq
    %v203 = vshrl.u32 %v202, 7
    %v204 = vadd.s32 %v203, 8
    %v205 = vstv %s201
    %v206 = vadd.s32 %v205, %v203
    %v207 = vadd.s32 %v205, %v204
    %vm208 = vcmp.lt.s32.totalorder %v206, 16
    %vm209 = vcmp.lt.s32.totalorder %v207, 16
    %v210 = vld [vmem:[%s134] sm:$0xff]
    %v211 = vld [vmem:[%s134 + $0x8] sm:$0xff]
    %v212 = vld [vmem:[%s146] sm:$0xff]
    %v213 = vld [vmem:[%s146 + $0x8] sm:$0xff]
    %vm214 = vcmask 261120
    %v215 = vsel %vm214, %v210, -inf
    %216 = vmax.xlane.f32.xlu0 %v215
    %v217 = vpop.xlane.xlu0 %216
    %v218 = vsel %vm214, %v211, -inf
    %219 = vmax.xlane.f32.xlu0 %v218
    %v220 = vpop.xlane.xlu0 %219
    %v221 = vsub.f32 %v210, %v217
    %v222 = vsub.f32 %v211, %v220
    %v223 = vmul.f32 %v221, 1.442695
    %v224 = vpow.pop %v223
    %v225 = vmul.f32 %v222, 1.442695
    %v226 = vpow.pop %v225
    %v227 = vsel %vm214, %v224, 0.0
    %228 = vadd.xlane.f32.xlu0 %v227
    %v229 = vpop.xlane.xlu0 %228
    %v230 = vsel %vm214, %v226, 0.0
    %231 = vadd.xlane.f32.xlu0 %v230
    %v232 = vpop.xlane.xlu0 %231
    %v233 = vlog2.pop %v229
    %v234 = vmul.f32 %v233, 0.6931472
    %v235 = vlog2.pop %v232
    %v236 = vmul.f32 %v235, 0.6931472
    %v237 = vadd.f32 %v234, %v217
    %v238 = vadd.f32 %v236, %v220
    %v239 = vlaneseq
    %v240 = vand.u32 %v239, 127
    %241 = vset.pattern.permute.xlu0 0
    %242 = vperm.xlu0 %241, %v212
    %v243 = vpop.permute.xlu0 %242
    %244 = vset.pattern.permute.xlu0 0
    %245 = vperm.xlu0 %244, %v213
    %v246 = vpop.permute.xlu0 %245
    %vm247 = vcmp.eq.s32.totalorder %v240, %v243
    %vm248 = vcmp.eq.s32.totalorder %v240, %v246
    %v249 = vsel %vm247, %v210, 0.0
    %v250 = vsel %vm248, %v211, 0.0
    %v251 = vsel %vm214, %v249, 0.0
    %252 = vadd.xlane.f32.xlu0 %v251
    %v253 = vpop.xlane.xlu0 %252
    %v254 = vsel %vm214, %v250, 0.0
    %255 = vadd.xlane.f32.xlu0 %v254
    %v256 = vpop.xlane.xlu0 %255
    %vm257 = vcmp.ne.s32.totalorder %v212, 0
    %vm258 = vcmp.ne.s32.totalorder %v213, 0
    %vm259 = vmand %vm208, %vm257
    %vm260 = vmand %vm209, %vm258
    %v261 = vld [vmem:[#allocation2] sm:$0xff]
    %v262 = vld [vmem:[#allocation2 + $0x8] sm:$0xff]
    %v263 = vsub.f32 %v237, %v253
    %v264 = vsub.f32 %v238, %v256
    %v265 = vsel %vm259, %v263, 0.0
    %v266 = vsel %vm260, %v264, 0.0
    %v267 = vadd.f32 %v261, %v265
    %v268 = vadd.f32 %v262, %v266
    %vm269 = vcmask 7168
    %270 = vst.msk [vmem:[#allocation2] sm:$0xff] %vm269, %v267
    %271 = vst.msk [vmem:[#allocation2 + $0x8] sm:$0xff] %vm269, %v268
    %v272 = vld [vmem:[#allocation3] sm:$0xff]
    %v273 = vld [vmem:[#allocation3 + $0x8] sm:$0xff]
    %v274 = vsel %vm259, 1, 0
    %v275 = vsel %vm260, 1, 0
    %v276 = vcvt.s32.f32 %v274
    %v277 = vcvt.s32.f32 %v275
    %v278 = vadd.f32 %v272, %v276
    %v279 = vadd.f32 %v273, %v277
    %280 = vst.msk [vmem:[#allocation3] sm:$0xff] %vm269, %v278
    %281 = vst.msk [vmem:[#allocation3 + $0x8] sm:$0xff] %vm269, %v279
    %v282 = vld [vmem:[%s158] sm:$0xff]
    %v283 = vld [vmem:[%s158 + $0x8] sm:$0xff]
    %v284 = vld [vmem:[%s170] sm:$0xff]
    %v285 = vld [vmem:[%s170 + $0x8] sm:$0xff]
    %v286 = vld [vmem:[%s182] sm:$0xff]
    %v287 = vld [vmem:[%s182 + $0x8] sm:$0xff]
    %v288 = vsub.f32 %v282, %v284
    %v289 = vsub.f32 %v283, %v285
    %v290 = vld [vmem:[#allocation4] sm:$0xff]
    %v291 = vld [vmem:[#allocation4 + $0x8] sm:$0xff]
    %v292 = vmul.f32 %v286, %v288
    %v293 = vmul.f32 %v287, %v289
    %v294 = vmul.f32 %v292, %v288
    %v295 = vmul.f32 %v293, %v289
    %v296 = vsel %vm208, %v294, 0.0
    %v297 = vsel %vm209, %v295, 0.0
    %v298 = vadd.f32 %v290, %v296
    %v299 = vadd.f32 %v291, %v297
    %300 = vst.msk [vmem:[#allocation4] sm:$0xff] %vm269, %v298
    %301 = vst.msk [vmem:[#allocation4 + $0x8] sm:$0xff] %vm269, %v299
    %v302 = vld [vmem:[#allocation5] sm:$0xff]
    %v303 = vld [vmem:[#allocation5 + $0x8] sm:$0xff]
    %v304 = vsel %vm208, %v286, 0.0
    %v305 = vsel %vm209, %v287, 0.0
    %v306 = vadd.f32 %v302, %v304
    %v307 = vadd.f32 %v303, %v305
    %308 = vst.msk [vmem:[#allocation5] sm:$0xff] %vm269, %v306
    %309 = vst.msk [vmem:[#allocation5 + $0x8] sm:$0xff] %vm269, %v307
    // Predicated region
    $region26: #{tpu_custom_call.1} parent=1 // pred_check
      %p310 = pneg %p187
    $region27: #{tpu_custom_call.1} parent=1 // pred_check_branch
      %312 = sbr.rel (%p310) target = $region29
    $region28: #{tpu_custom_call.1} parent=1 // pred_region
      %v313 = vld [vmem:[#allocation2] sm:$0xff]
      %v314 = vld [vmem:[#allocation2 + $0x8] sm:$0xff]
      %v315 = vsel %vm269, %v313, 0.0
      %v316 = vsel %vm269, %v314, 0.0
      %v317 = vadd.f32 %v315, %v316
      %318 = vadd.xlane.f32.xlu0 %v317
      %v319 = vpop.xlane.xlu0 %318
      %v320 = vrot.slane %v319, 4
      %v321 = vadd.f32 %v319, %v320
      %v322 = vrot.slane %v321, 2
      %v323 = vadd.f32 %v321, %v322
      %v324 = vrot.slane %v323, 1
      %v325 = vadd.f32 %v323, %v324
      %s326 = vtos %v325
      %v327 = vstv %s326
      %vm328 = vcmask 0
      %329 = vst.msk [vmem:[#allocation6] sm:$0x1] %vm328, %v327
      %v330 = vld [vmem:[#allocation3] sm:$0xff]
      %v331 = vld [vmem:[#allocation3 + $0x8] sm:$0xff]
      %v332 = vsel %vm269, %v330, 0.0
      %v333 = vsel %vm269, %v331, 0.0
      %v334 = vadd.f32 %v332, %v333
      %335 = vadd.xlane.f32.xlu0 %v334
      %v336 = vpop.xlane.xlu0 %335
      %v337 = vrot.slane %v336, 4
      %v338 = vadd.f32 %v336, %v337
      %v339 = vrot.slane %v338, 2
      %v340 = vadd.f32 %v338, %v339
      %v341 = vrot.slane %v340, 1
      %v342 = vadd.f32 %v340, %v341
      %s343 = vtos %v342
      %v344 = vstv %s343
      %345 = vst.msk [vmem:[#allocation8] sm:$0x1] %vm328, %v344
      %v346 = vld [vmem:[#allocation4] sm:$0xff]
      %v347 = vld [vmem:[#allocation4 + $0x8] sm:$0xff]
      %v348 = vsel %vm269, %v346, 0.0
      %v349 = vsel %vm269, %v347, 0.0
      %v350 = vadd.f32 %v348, %v349
      %351 = vadd.xlane.f32.xlu0 %v350
      %v352 = vpop.xlane.xlu0 %351
      %v353 = vrot.slane %v352, 4
      %v354 = vadd.f32 %v352, %v353
      %v355 = vrot.slane %v354, 2
      %v356 = vadd.f32 %v354, %v355
      %v357 = vrot.slane %v356, 1
      %v358 = vadd.f32 %v356, %v357
      %s359 = vtos %v358
      %v360 = vstv %s359
      %361 = vst.msk [vmem:[#allocation10] sm:$0x1] %vm328, %v360
      %v362 = vld [vmem:[#allocation5] sm:$0xff]
      %v363 = vld [vmem:[#allocation5 + $0x8] sm:$0xff]
      %v364 = vsel %vm269, %v362, 0.0
      %v365 = vsel %vm269, %v363, 0.0
      %v366 = vadd.f32 %v364, %v365
      %367 = vadd.xlane.f32.xlu0 %v366
      %v368 = vpop.xlane.xlu0 %367
      %v369 = vrot.slane %v368, 4
      %v370 = vadd.f32 %v368, %v369
      %v371 = vrot.slane %v370, 2
      %v372 = vadd.f32 %v370, %v371
      %v373 = vrot.slane %v372, 1
      %v374 = vadd.f32 %v372, %v373
      %s375 = vtos %v374
      %v376 = vstv %s375
      %377 = vst.msk [vmem:[#allocation11] sm:$0x1] %vm328, %v376
    $region29: #{tpu_custom_call.1} parent=1 // pred_fallthru
      _
    // Predicated region
    $region30: #{tpu_custom_call.1} parent=1 // pred_check
      _
    $region31: #{tpu_custom_call.1} parent=1 // pred_check_branch
      %379 = sbr.rel (0) target = $region33
    $region32: #{tpu_custom_call.1} parent=1 // pred_region
      %381 = vsyncadd [#allocation7], 0
      %s383 = sshll.u32 [#allocation6], 4
      %s384 = int_to_ptr.vmem [resolvable:$true] %s383
      %s385 = sshll.u32 %s5, 4
      %s386 = int_to_ptr.hbm [resolvable:$true] %s385
      %388 = dma.vmem_to_hbm [thread:$0]  %s384, 16, %s386, [#allocation7]
    $region33: #{tpu_custom_call.1} parent=1 // pred_fallthru
      _
    // Predicated region
    $region34: #{tpu_custom_call.1} parent=1 // pred_check
      _
    $region35: #{tpu_custom_call.1} parent=1 // pred_check_branch
      %390 = sbr.rel (0) target = $region37
    $region36: #{tpu_custom_call.1} parent=1 // pred_region
      %392 = vsyncadd [#allocation9], 0
      %s394 = sshll.u32 [#allocation8], 4
      %s395 = int_to_ptr.vmem [resolvable:$true] %s394
      %s396 = sshll.u32 %s6, 4
      %s397 = int_to_ptr.hbm [resolvable:$true] %s396
      %399 = dma.vmem_to_hbm [thread:$0]  %s395, 16, %s397, [#allocation9]
    $region37: #{tpu_custom_call.1} parent=1 // pred_fallthru
      _
    // Predicated region
    $region38: #{tpu_custom_call.1} parent=1 // pred_check
      _
    $region39: #{tpu_custom_call.1} parent=1 // pred_check_branch
      %401 = sbr.rel (0) target = $region41
    $region40: #{tpu_custom_call.1} parent=1 // pred_region
      %403 = vsyncadd [#allocation9], 0
      %s405 = sshll.u32 [#allocation10], 4
      %s406 = int_to_ptr.vmem [resolvable:$true] %s405
      %s407 = sshll.u32 %s7, 4
      %s408 = int_to_ptr.hbm [resolvable:$true] %s407
      %410 = dma.vmem_to_hbm [thread:$0]  %s406, 16, %s408, [#allocation9]
    $region41: #{tpu_custom_call.1} parent=1 // pred_fallthru
      _
    // Predicated region
    $region42: #{tpu_custom_call.1} parent=1 // pred_check
      _
    $region43: #{tpu_custom_call.1} parent=1 // pred_check_branch
      %412 = sbr.rel (0) target = $region45
    $region44: #{tpu_custom_call.1} parent=1 // pred_region
      %414 = vsyncadd [#allocation12], 0
      %s416 = sshll.u32 [#allocation11], 4
      %s417 = int_to_ptr.vmem [resolvable:$true] %s416
      %s418 = sshll.u32 %s8, 4
      %s419 = int_to_ptr.hbm [resolvable:$true] %s418
      %421 = dma.vmem_to_hbm [thread:$0]  %s417, 16, %s419, [#allocation12]
    $region45: #{tpu_custom_call.1} parent=1 // pred_fallthru
      _
    // Predicated region
    $region46: #{tpu_custom_call.1} parent=1 // pred_check
      _
    $region47: #{tpu_custom_call.1} parent=1 // pred_check_branch
      %423 = sbr.rel (0) target = $region49
    $region48: #{tpu_custom_call.1} parent=1 // pred_region
      %425 = dma.done [#allocation7], 16
    $region49: #{tpu_custom_call.1} parent=1 // pred_fallthru
      _
    // Predicated region
    $region50: #{tpu_custom_call.1} parent=1 // pred_check
      _
    $region51: #{tpu_custom_call.1} parent=1 // pred_check_branch
      %427 = sbr.rel (0) target = $region53
    $region52: #{tpu_custom_call.1} parent=1 // pred_region
      %429 = dma.done [#allocation9], 16
    $region53: #{tpu_custom_call.1} parent=1 // pred_fallthru
      _
    // Predicated region
    $region54: #{tpu_custom_call.1} parent=1 // pred_check
      _
    $region55: #{tpu_custom_call.1} parent=1 // pred_check_branch
      %431 = sbr.rel (0) target = $region57
    $region56: #{tpu_custom_call.1} parent=1 // pred_region
      %433 = dma.done [#allocation9], 16
    $region57: #{tpu_custom_call.1} parent=1 // pred_fallthru
      _
    // Predicated region
    $region58: #{tpu_custom_call.1} parent=1 // pred_check
      _
    $region59: #{tpu_custom_call.1} parent=1 // pred_check_branch
      %435 = sbr.rel (0) target = $region61
    $region60: #{tpu_custom_call.1} parent=1 // pred_region
      %437 = dma.done [#allocation12], 16
    $region61: #{tpu_custom_call.1} parent=1 // pred_fallthru
      _
    %438 = vsyncpa [#allocation7], 1
    %439 = vsyncpa [#allocation9], 1
    %440 = vsyncpa [#allocation12], 1

</llo_original>
